<compile_context>
chip_gen: v5e
topology: v5e:2x2
jax: 0.10.0
libtpu: 0.0.40
codegen_flags: <defaults>
</compile_context>

<pallas_src>
import functools

import jax
import jax.numpy as jnp
from jax.experimental import pallas as pl
from jax.experimental.pallas import tpu as pltpu


def linear_model_kernel(x_ref, w_ref, b_ref, o_ref):
    # --- LayerNorm over last dim, f32 math (eps matches PyTorch default 1e-5).
    #     gamma/beta are folded into w_ref/b_ref at parameter-prep time.
    x = x_ref[...]                                              # (TB, D) f32
    mean = jnp.mean(x, axis=-1, keepdims=True)                  # (TB, 1)
    centered = x - mean
    var = jnp.mean(centered * centered, axis=-1, keepdims=True)
    xn = centered * jax.lax.rsqrt(var + 1e-5)                   # (TB, D)

    # --- Dropout (eval mode) == identity ---

    # --- Linear on the MXU: canonical [M,K]x[K,N], bf16 operands, f32 accum.
    #     w_ref is the prepped (D, C_pad) bf16 weight, VMEM-resident across tiles.
    y = jnp.dot(xn.astype(jnp.bfloat16), w_ref[...],
                preferred_element_type=jnp.float32)             # (TB, C_pad)
    o_ref[...] = (y + b_ref[...]).astype(o_ref.dtype)


def prepare_params(w, b, gamma, beta):
    """One-time parameter prep (outside the hot path).

    Folds the LayerNorm affine into the linear layer and lane-pads the output
    feature dim to a multiple of 128:
        y = ((x - m) * inv_std * gamma + beta) @ w.T + b
          = ((x - m) * inv_std) @ (w * gamma).T + (w @ beta + b)
    Returns:
        w_t:   (D, C_pad) bf16, pre-transposed, padded columns are zero.
        b_pad: (1, C_pad) f32, padded entries are zero.
    """
    C, D = w.shape
    w_fold = w * gamma[None, :]                 # (C, D)
    b_fold = b + w @ beta                       # (C,)

    c_pad = pl.cdiv(C, 128) * 128               # lane-dense output width
    w_pad = jnp.zeros((c_pad, D), w.dtype).at[:C].set(w_fold)
    b_pad = jnp.zeros((c_pad,), b.dtype).at[:C].set(b_fold)

    w_t = jnp.transpose(w_pad).astype(jnp.bfloat16)   # (D, C_pad) bf16
    return w_t, b_pad.reshape(1, c_pad)


@functools.partial(jax.jit, static_argnames=("num_classes", "block_b"))
def linear_model_forward(x, w_t, b_pad, *, num_classes, block_b=4096):
    """x: (B, D) f32.  w_t: (D, C_pad) bf16 prepped weight.  b_pad: (1, C_pad) f32."""
    B, D = x.shape
    c_pad = w_t.shape[1]

    # --- Batch tile selection -------------------------------------------------
    # Big tile (>= ~2 MiB/step of x+out) to amortize per-step overhead; when
    # B > block_b, cap so the grid has >= 2 tiles (lets v7x use both TCs).
    if B <= block_b:
        tb = B                                   # single tile == full dim, legal
    else:
        tb = min(block_b, max(8, ((B // 2) // 8) * 8))

    # Pad batch so it divides the tile (zero rows are LayerNorm-safe).
    b_padded = pl.cdiv(B, tb) * tb
    if b_padded != B:
        x = jnp.pad(x, ((0, b_padded - B), (0, 0)))
    grid = (b_padded // tb,)

    cost = pl.CostEstimate(
        flops=2 * b_padded * D * c_pad,
        transcendentals=b_padded,                # one rsqrt per row
        bytes_accessed=(x.size * 4 + w_t.size * 2 + b_pad.size * 4
                        + b_padded * c_pad * 4),
    )

    out = pl.pallas_call(
        linear_model_kernel,
        out_shape=jax.ShapeDtypeStruct((b_padded, c_pad), x.dtype),
        grid_spec=pltpu.PrefetchScalarGridSpec(
            num_scalar_prefetch=0,
            grid=grid,
            in_specs=[
                pl.BlockSpec((tb, D), lambda i: (i, 0)),        # x: streamed over batch
                pl.BlockSpec((D, c_pad), lambda i: (0, 0)),     # W (D, C_pad): resident
                pl.BlockSpec((1, c_pad), lambda i: (0, 0)),     # bias: resident
            ],
            out_specs=pl.BlockSpec((tb, c_pad), lambda i: (i, 0)),
        ),
        compiler_params=pltpu.CompilerParams(
            dimension_semantics=("parallel",)),  # batch tiles split across TCs (v7x)
        cost_estimate=cost,
    )(x, w_t, b_pad)

    return out[:B, :num_classes]


if __name__ == "__main__":
    # Small shapes consistent with the module: batch=8, input_dim=32, num_classes=16.
    B, D, C = 8, 32, 16
    key = jax.random.PRNGKey(0)
    kx, kw, kb, kg, kbe = jax.random.split(key, 5)

    x = jax.random.normal(kx, (B, D), dtype=jnp.float32)

    # Deterministic parameter init (PyTorch-Linear-like uniform bound), synthetic.
    bound = 1.0 / (D ** 0.5)
    w = jax.random.uniform(kw, (C, D), minval=-bound, maxval=bound, dtype=jnp.float32)
    b = jax.random.uniform(kb, (C,), minval=-bound, maxval=bound, dtype=jnp.float32)
    # Non-trivial LayerNorm affine so the gamma/beta fold is actually exercised.
    gamma = 1.0 + 0.1 * jax.random.normal(kg, (D,), dtype=jnp.float32)
    beta = 0.1 * jax.random.normal(kbe, (D,), dtype=jnp.float32)

    w_t, b_pad = prepare_params(w, b, gamma, beta)
    out = linear_model_forward(x, w_t, b_pad, num_classes=C)
    jax.block_until_ready(out)

    # Pure-JAX f32 reference (eval-mode dropout == identity).  Tolerance covers
    # the bf16 MXU operand cast (f32 accumulation).
    mean = jnp.mean(x, axis=-1, keepdims=True)
    var = jnp.mean((x - mean) ** 2, axis=-1, keepdims=True)
    xn = (x - mean) * jax.lax.rsqrt(var + 1e-5) * gamma + beta
    ref = xn @ w.T + b

    assert out.shape == (B, C)
    assert jnp.allclose(out, ref, atol=2e-2, rtol=2e-2), (
        float(jnp.max(jnp.abs(out - ref))))

    print("KERNEL_OK")
</pallas_src>

<mosaic_0001>
module attributes {stable_mosaic.version = 11 : i64} {
  func.func @linear_model_kernel(%arg0: i32, %arg1: memref<8x32xf32, #tpu.memory_space<vmem>>, %arg2: memref<32x128xbf16, #tpu.memory_space<vmem>>, %arg3: memref<1x128xf32, #tpu.memory_space<vmem>>, %arg4: memref<8x128xf32, #tpu.memory_space<vmem>>) attributes {dimension_semantics = [#tpu.dimension_semantics<parallel>], iteration_bounds = array<i64: 1>, scalar_prefetch = 0 : i64, scratch_operands = 0 : i64, tpu.core_type = #tpu.core_type<tc>, window_params = [{transform_indices = @transform_0, window_bounds = array<i64: 8, 32>}, {pipeline_mode = #tpu.pipeline_mode<synchronous>, transform_indices = @transform_1, window_bounds = array<i64: 32, 128>}, {pipeline_mode = #tpu.pipeline_mode<synchronous>, transform_indices = @transform_2, window_bounds = array<i64: 1, 128>}, {transform_indices = @transform_3, window_bounds = array<i64: 8, 128>}]} {
    %c0 = arith.constant 0 : index
    %c0_0 = arith.constant 0 : index
    %0 = vector.load %arg1[%c0, %c0_0] : memref<8x32xf32, #tpu.memory_space<vmem>>, vector<8x32xf32>
    %cst = arith.constant dense<0.000000e+00> : vector<8xf32>
    %1 = vector.multi_reduction <add>, %0, %cst [1] : vector<8x32xf32> to vector<8xf32>
    %2 = vector.shape_cast %1 : vector<8xf32> to vector<8x1xf32>
    %cst_1 = arith.constant 3.200000e+01 : f32
    %3 = vector.broadcast %cst_1 : f32 to vector<8x1xf32>
    %4 = arith.divf %2, %3 : vector<8x1xf32>
    %5 = vector.broadcast %4 : vector<8x1xf32> to vector<8x32xf32>
    %6 = arith.subf %0, %5 : vector<8x32xf32>
    %7 = arith.mulf %6, %6 : vector<8x32xf32>
    %cst_2 = arith.constant dense<0.000000e+00> : vector<8xf32>
    %8 = vector.multi_reduction <add>, %7, %cst_2 [1] : vector<8x32xf32> to vector<8xf32>
    %9 = vector.shape_cast %8 : vector<8xf32> to vector<8x1xf32>
    %cst_3 = arith.constant 3.200000e+01 : f32
    %10 = vector.broadcast %cst_3 : f32 to vector<8x1xf32>
    %11 = arith.divf %9, %10 : vector<8x1xf32>
    %cst_4 = arith.constant 9.99999974E-6 : f32
    %12 = vector.broadcast %cst_4 : f32 to vector<8x1xf32>
    %13 = arith.addf %11, %12 : vector<8x1xf32>
    %14 = math.rsqrt %13 : vector<8x1xf32>
    %15 = vector.broadcast %14 : vector<8x1xf32> to vector<8x32xf32>
    %16 = arith.mulf %6, %15 : vector<8x32xf32>
    %17 = arith.truncf %16 : vector<8x32xf32> to vector<8x32xbf16>
    %c0_5 = arith.constant 0 : index
    %c0_6 = arith.constant 0 : index
    %18 = vector.load %arg2[%c0_5, %c0_6] : memref<32x128xbf16, #tpu.memory_space<vmem>>, vector<32x128xbf16>
    %cst_7 = arith.constant dense<0.000000e+00> : vector<8x128xf32>
    %19 = tpu.matmul %17, %18, %cst_7 {dimension_numbers = #tpu.dot_dimension_numbers<[1], [0], [0], [1], [0, 0, 1, 1], [], []>} : vector<8x32xbf16>, vector<32x128xbf16>, vector<8x128xf32> -> vector<8x128xf32>
    %c0_8 = arith.constant 0 : index
    %c0_9 = arith.constant 0 : index
    %20 = vector.load %arg3[%c0_8, %c0_9] : memref<1x128xf32, #tpu.memory_space<vmem>>, vector<1x128xf32>
    %21 = vector.broadcast %20 : vector<1x128xf32> to vector<8x128xf32>
    %22 = arith.addf %19, %21 : vector<8x128xf32>
    %c0_10 = arith.constant 0 : index
    %c0_11 = arith.constant 0 : index
    %23 = vector.load %arg4[%c0_10, %c0_11] : memref<8x128xf32, #tpu.memory_space<vmem>>, vector<8x128xf32>
    tpu.vector_store %arg4[%c0_10, %c0_11], %22 {strides = array<i32>} : memref<8x128xf32, #tpu.memory_space<vmem>>, vector<8x128xf32>,
    return
  }
  func.func @transform_0(%arg0: i32) -> (i32, i32) {
    %c0_i32 = arith.constant 0 : i32
    %c0_i32_0 = arith.constant 0 : i32
    return %arg0, %c0_i32 : i32, i32
  }
  func.func @transform_1(%arg0: i32) -> (i32, i32) {
    %c0_i32 = arith.constant 0 : i32
    %c0_i32_0 = arith.constant 0 : i32
    %c0_i32_1 = arith.constant 0 : i32
    return %c0_i32, %c0_i32_0 : i32, i32
  }
  func.func @transform_2(%arg0: i32) -> (i32, i32) {
    %c0_i32 = arith.constant 0 : i32
    %c0_i32_0 = arith.constant 0 : i32
    %c0_i32_1 = arith.constant 0 : i32
    return %c0_i32, %c0_i32_0 : i32, i32
  }
  func.func @transform_3(%arg0: i32) -> (i32, i32) {
    %c0_i32 = arith.constant 0 : i32
    %c0_i32_0 = arith.constant 0 : i32
    return %arg0, %c0_i32 : i32, i32
  }
}

</mosaic_0001>

<llo_original>
// kernel: linear_model_forward.1
$region0: #{linear_model_forward.1}
  #allocation0 [shape = 'u32[]', space=smem, size = 0x4, offset = 0x4, fixed_abs, tag = 'smem constant byte address 0x4 - core index']
  #allocation1 [shape = 'u32[72,128]{1,0:T(1,128)}', space=vmem, size = 0x9000, scoped, tag = 'internal scratch']
  %s0 = inlined_call_operand.hbm [shape: f32[8,32], index: 0, kind: input, shape index: {}]
  %s1 = inlined_call_operand.hbm [shape: bf16[32,128], index: 1, kind: input, shape index: {}]
  %s2 = inlined_call_operand.vmem [shape: f32[1,128], index: 2, kind: input, shape index: {}]
  %s3 = inlined_call_operand.hbm [shape: f32[8,128], index: 3, kind: output, shape index: {}]
  %s4 = sld [smem:[#allocation0]]
  $region30: #{linear_model_forward.1} parent=0
    _
  %s6 = ssub.s32 1, %s4
  %s7 = scalar_select 0, %s6, %s4
  $region1: #{linear_model_forward.1} parent=0
    #allocation2 [shape = 'u8[4096]{0}', space=vmem, size = 0x1000, scoped, tag = 'input window, operand 0, single buffered']
    #allocation3 [shape = 's32[1]{0}', space=sflag, size = 0x4, scoped, tag = 'scoped memory for linear_model_forward.1']
    #allocation4 [shape = 's32[1]{0}', space=sflag, size = 0x4, scoped, tag = 'scoped memory for linear_model_forward.1']
    #allocation5 [shape = 'u8[8192]{0}', space=vmem, size = 0x2000, scoped, tag = 'input window, operand 1, single buffered']
    #allocation6 [shape = 's32[1]{0}', space=sflag, size = 0x4, scoped, tag = 'scoped memory for linear_model_forward.1']
    #allocation7 [shape = 'u8[4096]{0}', space=vmem, size = 0x1000, scoped, tag = 'output window, operand 0, single buffered']
    %8 = vsyncpa [#allocation3], 0
    %9 = vsyncpa [#allocation6], 0
    %10 = vsyncpa [#allocation4], 0
    // Predicated region
    $region2: #{linear_model_forward.1} parent=1 // pred_check
      _
    $region3: #{linear_model_forward.1} parent=1 // pred_check_branch
      %12 = sbr.rel (0) target = $region5
    $region4: #{linear_model_forward.1} parent=1 // pred_region
      %14 = vsyncadd [#allocation3], 0
      %s16 = sshll.u32 %s0, 4
      %s17 = int_to_ptr.hbm [resolvable:$true] %s16
      %s18 = sshll.u32 [#allocation2], 4
      %s19 = int_to_ptr.vmem [resolvable:$true] %s18
      %21 = dma.hbm_to_vmem [thread:$0]  %s17, 128, %s19, [#allocation3]
    $region5: #{linear_model_forward.1} parent=1 // pred_fallthru
      _
    // Predicated region
    $region6: #{linear_model_forward.1} parent=1 // pred_check
      _
    $region7: #{linear_model_forward.1} parent=1 // pred_check_branch
      %23 = sbr.rel (0) target = $region9
    $region8: #{linear_model_forward.1} parent=1 // pred_region
      %25 = vsyncadd [#allocation6], 0
      %s26 = sshll.u32 %s1, 4
      %s27 = int_to_ptr.hbm [resolvable:$true] %s26
      %s28 = sshll.u32 [#allocation5], 4
      %s29 = int_to_ptr.vmem [resolvable:$true] %s28
      %34 = dma.hbm_to_vmem [thread:$0]  %s27, 256, %s29, [#allocation6], 64, 64, 4
    $region9: #{linear_model_forward.1} parent=1 // pred_fallthru
      _
    // Predicated region
    $region10: #{linear_model_forward.1} parent=1 // pred_check
      _
    $region11: #{linear_model_forward.1} parent=1 // pred_check_branch
      %36 = sbr.rel (0) target = $region13
    $region12: #{linear_model_forward.1} parent=1 // pred_region
      _
    $region13: #{linear_model_forward.1} parent=1 // pred_fallthru
      _
    // Predicated region
    $region14: #{linear_model_forward.1} parent=1 // pred_check
      _
    $region15: #{linear_model_forward.1} parent=1 // pred_check_branch
      %38 = sbr.rel (0) target = $region17
    $region16: #{linear_model_forward.1} parent=1 // pred_region
      %40 = dma.done [#allocation3], 128
    $region17: #{linear_model_forward.1} parent=1 // pred_fallthru
      _
    // Predicated region
    $region18: #{linear_model_forward.1} parent=1 // pred_check
      _
    $region19: #{linear_model_forward.1} parent=1 // pred_check_branch
      %42 = sbr.rel (0) target = $region21
    $region20: #{linear_model_forward.1} parent=1 // pred_region
      %44 = dma.done [#allocation6], 256
    $region21: #{linear_model_forward.1} parent=1 // pred_fallthru
      _
    %v46 = vld [vmem:[#allocation2] sm:$0xff]
    %vm47 = vcmask 261120
    %v48 = vsel %vm47, %v46, 0.0
    %49 = vadd.xlane.f32.xlu0 %v48
    %v50 = vpop.xlane.xlu0 %49
    %v51 = vrcp.pop 32.0
    %v52 = vmul.f32 32.0, %v51
    %v53 = vsub.f32 1.0, %v52
    %v54 = vmul.f32 %v51, %v53
    %v55 = vadd.f32 %v51, %v54
    %vm56 = vweird.f32 %v51
    %v57 = vsel %vm56, %v51, %v55
    %v58 = vmul.f32 %v50, %v57
    %v59 = vsub.f32 %v46, %v58
    %v60 = vmul.f32 %v59, %v59
    %v61 = vsel %vm47, %v60, 0.0
    %62 = vadd.xlane.f32.xlu0 %v61
    %v63 = vpop.xlane.xlu0 %62
    %v64 = vmul.f32 %v63, %v57
    %v65 = vadd.f32 %v64, 1e-05
    %v66 = vrsqrt.pop %v65
    %v67 = vmul.f32 %v66, %v65
    %v68 = vmul.f32 %v67, %v66
    %v69 = vmul.f32 0.5, %v68
    %v70 = vsub.f32 1.5, %v69
    %v71 = vmul.f32 %v66, %v70
    %vm72 = vweird.f32 %v65
    %vm73 = vweird.f32 %v66
    %vm74 = vmor %vm72, %vm73
    %v75 = vsel %vm74, %v66, %v71
    %v76 = vmul.f32 %v59, %v75
    %v77 = vpack.c.bf16 %v76, %v76
    %v78 = vld [vmem:[#allocation5] sm:$0xf]
    %v79 = vld [vmem:[#allocation5 + $0x4] sm:$0xf]
    %v80 = vld [vmem:[#allocation5 + $0x8] sm:$0xf]
    %v81 = vld [vmem:[#allocation5 + $0xc] sm:$0xf]
    %v82 = vld [vmem:[%s2] sm:$0x1]
    %v84 = vperm.slane %v82, 0
    %v90 = vunpack.c.l.b16 %v78
    %v91 = vunpack.c.l.b16 %v79
    %v92 = vunpack.c.l.b16 %v80
    %v93 = vunpack.c.l.b16 %v81
    %v94 = vpack.c.b16 %v91, %v90
    %v95 = vpack.c.b16 %v93, %v92
    %v99 = vsel %vm47, %v77, 0
    %101 = vmatpush.bf16.msra.mxu0 0
    %102 = vmatpush.bf16.msra.mxu0 0
    %103 = vmatpush.bf16.msra.mxu0 0
    %104 = vmatpush.bf16.msra.mxu0 0
    %105 = vmatpush.bf16.msra.mxu0 0
    %106 = vmatpush.bf16.msra.mxu0 0
    %107 = vmatpush.bf16.msra.mxu0 %v95
    %108 = vmatpush.bf16.msra.mxu0 %v94
    %109 = vmatmul.bf16.gmra.mxu0 %v99
    %v110 = vpop.f32.mrf.mxu0
    %v111 = vadd.f32 %v84, %v110
    %v112 = vpop.f32.mrf.mxu0
    %113 = vdwg.mxu0
    %114 = vst [vmem:[#allocation7] sm:$0xff] %v111
    // Predicated region
    $region22: #{linear_model_forward.1} parent=1 // pred_check
      _
    $region23: #{linear_model_forward.1} parent=1 // pred_check_branch
      %116 = sbr.rel (0) target = $region25
    $region24: #{linear_model_forward.1} parent=1 // pred_region
      %118 = vsyncadd [#allocation4], 0
      %s120 = sshll.u32 [#allocation7], 4
      %s121 = int_to_ptr.vmem [resolvable:$true] %s120
      %s122 = sshll.u32 %s3, 4
      %s123 = int_to_ptr.hbm [resolvable:$true] %s122
      %125 = dma.vmem_to_hbm [thread:$0]  %s121, 128, %s123, [#allocation4]
    $region25: #{linear_model_forward.1} parent=1 // pred_fallthru
      _
    // Predicated region
    $region26: #{linear_model_forward.1} parent=1 // pred_check
      _
    $region27: #{linear_model_forward.1} parent=1 // pred_check_branch
      %127 = sbr.rel (0) target = $region29
    $region28: #{linear_model_forward.1} parent=1 // pred_region
      %129 = dma.done [#allocation4], 128
    $region29: #{linear_model_forward.1} parent=1 // pred_fallthru
      _
    %130 = vsyncpa [#allocation3], 1
    %131 = vsyncpa [#allocation6], 1
    %132 = vsyncpa [#allocation4], 1

</llo_original>
